<compile_context>
chip_gen: v6e
topology: v6e:2x2x1
jax: 0.10.0
libtpu: 0.0.40
codegen_flags: <defaults>
</compile_context>

<pallas_src>
import functools

import jax
import jax.numpy as jnp
from jax.experimental import pallas as pl
from jax.experimental.pallas import tpu as pltpu

H1 = 32   # conv1 output channels
H2 = 16   # conv2 output channels
MIB = 1024 * 1024


# ----------------------------- fused kernel ---------------------------------


def _fused_kernel(a_ref, xw1_ref, p_ref, w2t_ref, o_ref, xw2t_ref, *, tm):
    """grid=(2, num_tiles).  A resident in VMEM; xw2^T lives in VMEM scratch.

    phase 0, tile i: xw2t[:, rows] = (relu(A[rows,:] @ xW1 + b1) @ W2)^T
    phase 1, tile i: out[0, rows]  = relu(A[rows,:] @ xw2 + b2) @ wfc^T + bfc
    """
    ph = pl.program_id(0)
    i = pl.program_id(1)
    row0 = pl.multiple_of(i * tm, tm)
    a_tile = a_ref[pl.ds(row0, tm), :]                               # (tm, n_pad) bf16

    @pl.when(ph == 0)
    def _():
        agg = jnp.dot(a_tile, xw1_ref[...],
                      preferred_element_type=jnp.float32)            # (tm, 32) f32
        b1 = p_ref[0:1, 0:H1]                                         # (1, 32)
        h1 = jnp.maximum(agg + b1, 0.0).astype(jnp.bfloat16)          # ReLU, bf16 for MXU
        # (16, 32) . (tm, 32) contracting last dims -> lane-dense (16, tm)
        xw2t = jax.lax.dot_general(w2t_ref[...], h1,
                                   (((1,), (1,)), ((), ())),
                                   preferred_element_type=jnp.float32)
        xw2t_ref[:, pl.ds(row0, tm)] = xw2t.astype(xw2t_ref.dtype)
        # Defined values for the (later overwritten) phase-0 output writeback.
        o_ref[...] = jnp.zeros_like(o_ref)

    @pl.when(ph == 1)
    def _():
        # (tm, n_pad) . (16, n_pad) contracting last dims -> (tm, 16)
        agg = jax.lax.dot_general(a_tile, xw2t_ref[...],
                                  (((1,), (1,)), ((), ())),
                                  preferred_element_type=jnp.float32)
        b2 = p_ref[1:2, 0:H2]                                          # (1, 16)
        h2 = jnp.maximum(agg + b2, 0.0)                                # (tm, 16) f32
        wfc = p_ref[2:3, 0:H2]                                         # (1, 16)
        bfc = p_ref[3:4, 0:1]                                          # (1, 1)
        # (1, 16) . (tm, 16) contracting last dims -> lane-dense (1, tm)
        out = jax.lax.dot_general(wfc, h2, (((1,), (1,)), ((), ())),
                                  preferred_element_type=jnp.float32) + bfc
        o_ref[...] = out


# ------------------------ streaming (fallback) kernels -----------------------


def _stream_layer1_kernel(a_ref, xw1_ref, p_ref, w2t_ref, xw2t_ref):
    """Per row tile: xw2^T[:, rows] = (relu(A_tile @ xW1 + b1) @ W2)^T (bf16)."""
    agg = jnp.dot(a_ref[...], xw1_ref[...],
                  preferred_element_type=jnp.float32)
    h1 = jnp.maximum(agg + p_ref[0:1, 0:H1], 0.0).astype(jnp.bfloat16)
    xw2t = jax.lax.dot_general(w2t_ref[...], h1, (((1,), (1,)), ((), ())),
                               preferred_element_type=jnp.float32)
    xw2t_ref[...] = xw2t.astype(xw2t_ref.dtype)                        # (16, tm) lane-dense


def _stream_layer2_kernel(a_ref, xw2t_ref, p_ref, o_ref):
    """Per row tile: out = relu(A_tile @ xw2 + b2) @ wfc^T + bfc, nodes on lanes."""
    agg = jax.lax.dot_general(a_ref[...], xw2t_ref[...], (((1,), (1,)), ((), ())),
                              preferred_element_type=jnp.float32)      # (tm, 16)
    h2 = jnp.maximum(agg + p_ref[1:2, 0:H2], 0.0)
    out = jax.lax.dot_general(p_ref[2:3, 0:H2], h2, (((1,), (1,)), ((), ())),
                              preferred_element_type=jnp.float32) + p_ref[3:4, 0:1]
    o_ref[...] = out                                                   # (1, tm)


# ----------------------------- wrapper ---------------------------------------


def _vmem_capacity_bytes():
    try:
        return int(pltpu.get_tpu_info().vmem_capacity_bytes)
    except Exception:
        return 64 * MIB   # conservative (v7x-sized) default


def _fused_row_tile(n_pad):
    for tm in (512, 256, 128):
        if n_pad % tm == 0:
            return tm
    return 128


def _stream_row_tile(n_pad, a_budget_bytes):
    # Largest row tile whose double-buffered bf16 A slab fits the budget.
    for tm in (2048, 1024, 512, 256, 128):
        if n_pad % tm == 0 and 2 * tm * n_pad * 2 <= a_budget_bytes:
            return tm
    # TODO(synk): fail over to K (column) tiling with an f32 accumulator instead
    # of a full-width 128-row slab once n_pad gets this large.
    return 128


def _pack_params(b1, b2, wfc, bfc):
    """Pack the 1-row parameters into a single (8,128) f32 block (one DMA)."""
    p = jnp.zeros((8, 128), jnp.float32)
    p = p.at[0, :H1].set(jnp.reshape(b1, (H1,)).astype(jnp.float32))
    p = p.at[1, :H2].set(jnp.reshape(b2, (H2,)).astype(jnp.float32))
    p = p.at[2, :H2].set(jnp.reshape(wfc, (H2,)).astype(jnp.float32))
    p = p.at[3, 0].set(jnp.reshape(bfc, ()).astype(jnp.float32))
    return p


def _fused_forward(a_p, xw1, p, w2t, n_pad, vmem_limit):
    tm = _fused_row_tile(n_pad)
    num_tiles = n_pad // tm
    kern = functools.partial(_fused_kernel, tm=tm)
    return pl.pallas_call(
        kern,
        out_shape=jax.ShapeDtypeStruct((1, n_pad), jnp.float32),
        grid=(2, num_tiles),                                  # (phase, row tile)
        in_specs=[
            pl.BlockSpec((n_pad, n_pad), lambda ph, i: (0, 0)),   # A resident (1 HBM read)
            pl.BlockSpec((n_pad, H1), lambda ph, i: (0, 0)),      # resident x*W1 (bf16)
            pl.BlockSpec((8, 128), lambda ph, i: (0, 0)),         # packed params (f32)
            pl.BlockSpec((H2, H1), lambda ph, i: (0, 0)),         # resident W2^T (bf16)
        ],
        out_specs=pl.BlockSpec((1, tm), lambda ph, i: (0, i)),    # nodes on lanes
        scratch_shapes=[pltpu.VMEM((H2, n_pad), jnp.bfloat16)],   # persistent xw2^T
        compiler_params=pltpu.CompilerParams(
            dimension_semantics=("arbitrary", "arbitrary"),
            vmem_limit_bytes=vmem_limit),
    )(a_p, xw1, p, w2t)


def _stream_forward(a_p, xw1, p, w2t, n_pad, vmem_cap, vmem_limit):
    a_budget = 32 * MIB if vmem_cap <= 64 * MIB else 88 * MIB
    tm = _stream_row_tile(n_pad, a_budget)
    num_tiles = n_pad // tm
    cparams = pltpu.CompilerParams(
        dimension_semantics=("parallel",),                    # megacore sharding on v7x
        vmem_limit_bytes=vmem_limit)

    # ---- pass 1: xw2^T = (relu(A @ (x*W1) + b1) @ W2)^T ---------------------
    xw2t = pl.pallas_call(
        _stream_layer1_kernel,
        out_shape=jax.ShapeDtypeStruct((H2, n_pad), jnp.bfloat16),
        grid=(num_tiles,),
        in_specs=[
            pl.BlockSpec((tm, n_pad), lambda i: (i, 0)),      # streamed A row tile
            pl.BlockSpec((n_pad, H1), lambda i: (0, 0)),      # resident x*W1
            pl.BlockSpec((8, 128), lambda i: (0, 0)),         # packed params
            pl.BlockSpec((H2, H1), lambda i: (0, 0)),         # resident W2^T
        ],
        out_specs=pl.BlockSpec((H2, tm), lambda i: (0, i)),   # lane-dense output
        compiler_params=cparams,
    )(a_p, xw1, p, w2t)

    # ---- pass 2: out = relu(A @ xw2 + b2) @ wfc^T + bfc ---------------------
    out_row = pl.pallas_call(
        _stream_layer2_kernel,
        out_shape=jax.ShapeDtypeStruct((1, n_pad), jnp.float32),
        grid=(num_tiles,),
        in_specs=[
            pl.BlockSpec((tm, n_pad), lambda i: (i, 0)),      # streamed A row tile
            pl.BlockSpec((H2, n_pad), lambda i: (0, 0)),      # resident xw2^T
            pl.BlockSpec((8, 128), lambda i: (0, 0)),         # packed params
        ],
        out_specs=pl.BlockSpec((1, tm), lambda i: (0, i)),    # nodes on lanes
        compiler_params=cparams,
    )(a_p, xw2t, p)
    return out_row


def graphnet_forward(a_hat, x, w1, b1, w2, b2, wfc, bfc, force_path=None):
    n = x.shape[0]
    n_pad = max(128, ((n + 127) // 128) * 128)

    vmem_cap = _vmem_capacity_bytes()
    vmem_limit = int(max(48 * MIB, min(vmem_cap - 16 * MIB, 112 * MIB)))

    # Host-side glue: pad to vreg-friendly sizes, quantize streamed operands to
    # bf16 (padded rows/cols of A are zero, so padding never pollutes results).
    a_p = jnp.pad(a_hat.astype(jnp.float32),
                  ((0, n_pad - n), (0, n_pad - n))).astype(jnp.bfloat16)
    xw1 = jnp.pad(x.astype(jnp.float32) * w1.astype(jnp.float32),
                  ((0, n_pad - n), (0, 0))).astype(jnp.bfloat16)      # (n_pad, 32)
    p = _pack_params(b1, b2, wfc, bfc)                                # (8, 128) f32
    w2t = jnp.transpose(w2).astype(jnp.bfloat16)                      # (16, 32) bf16

    # Fused path iff a (conservatively double-buffered) resident bf16 A fits.
    a_resident_bytes = 2 * (n_pad * n_pad * 2)
    use_fused = a_resident_bytes <= int(0.6 * vmem_cap)
    if force_path == "fused":
        use_fused = True
    elif force_path == "stream":
        use_fused = False

    if use_fused:
        out_row = _fused_forward(a_p, xw1, p, w2t, n_pad, vmem_limit)
    else:
        out_row = _stream_forward(a_p, xw1, p, w2t, n_pad, vmem_cap, vmem_limit)

    return out_row[0, :n].reshape(n, 1)


# ------------------------- graph normalization glue -------------------------


def build_normalized_adjacency(edge_index, edge_weight, num_nodes):
    """PyG gcn_norm with improved=True: add_remaining_self_loops(fill=2.0)."""
    row, col = edge_index[0], edge_index[1]               # source, target
    ew = edge_weight.astype(jnp.float32)

    # Only add a self loop to nodes that do not already have one.
    has_loop = (jnp.zeros((num_nodes,), jnp.int32)
                .at[row].max((row == col).astype(jnp.int32))) > 0
    loop_w = jnp.where(has_loop, 0.0, 2.0).astype(jnp.float32)

    self_idx = jnp.arange(num_nodes, dtype=row.dtype)
    row = jnp.concatenate([row, self_idx])
    col = jnp.concatenate([col, self_idx])
    ew = jnp.concatenate([ew, loop_w])

    deg = jnp.zeros((num_nodes,), jnp.float32).at[col].add(ew)
    dinv = jnp.where(deg > 0.0, 1.0 / jnp.sqrt(deg), 0.0)
    norm = dinv[row] * ew * dinv[col]
    # message from source j aggregated at target i  =>  A_hat[i, j]
    a_hat = jnp.zeros((num_nodes, num_nodes), jnp.float32).at[col, row].add(norm)
    return a_hat


# ------------------------------- references ---------------------------------


def reference_forward_f32(a_hat, x, w1, b1, w2, b2, wfc, bfc):
    h1 = jnp.maximum(a_hat @ (x * w1) + b1, 0.0)
    h2 = jnp.maximum(a_hat @ (h1 @ w2) + b2, 0.0)
    return jnp.sum(h2 * wfc, axis=-1, keepdims=True) + bfc


def reference_forward_mirrored(a_bf, xw1_bf, b1, w2, b2, wfc, bfc, n):
    """Same bf16 quantization points as the kernels, f32 accumulation."""
    a = a_bf.astype(jnp.float32)
    h1 = jnp.maximum(a @ xw1_bf.astype(jnp.float32) + b1, 0.0)
    h1_bf = h1.astype(jnp.bfloat16).astype(jnp.float32)
    w2_bf = w2.astype(jnp.bfloat16).astype(jnp.float32)
    xw2 = (h1_bf @ w2_bf).astype(jnp.bfloat16).astype(jnp.float32)
    h2 = jnp.maximum(a @ xw2 + b2, 0.0)
    out = jnp.sum(h2 * wfc, axis=-1, keepdims=True) + bfc
    return out[:n]


# ---------------------------------- main -------------------------------------


if __name__ == "__main__":
    F_IN = 1

    for N in (64, 200):
        key = jax.random.PRNGKey(0)
        k_x, k_w, k_w1, k_w2, k_wfc, k_b, k_b1, k_b2 = jax.random.split(key, 8)

        # Node features [N, 1]
        x = jax.random.normal(k_x, (N, F_IN), dtype=jnp.float32)

        # Ring graph, both directions: edge_index [2, 2N], edge_weighs [2N]
        src = jnp.arange(N, dtype=jnp.int32)
        dst = (src + 1) % N
        edge_index = jnp.stack([jnp.concatenate([src, dst]),
                                jnp.concatenate([dst, src])], axis=0)
        edge_weighs = jax.random.uniform(k_w, (2 * N,), jnp.float32, 0.5, 1.5)

        # Deterministic parameter init; fc weight stored transposed (1, 16).
        w1 = jax.random.normal(k_w1, (F_IN, H1), jnp.float32) / jnp.sqrt(F_IN + H1)
        b1 = 0.05 * jax.random.normal(k_b1, (1, H1), jnp.float32)
        w2 = jax.random.normal(k_w2, (H1, H2), jnp.float32) / jnp.sqrt(H1 + H2)
        b2 = 0.05 * jax.random.normal(k_b2, (1, H2), jnp.float32)
        wfc = jax.random.normal(k_wfc, (1, H2), jnp.float32) / jnp.sqrt(H2)
        bfc = jax.random.uniform(k_b, (1, 1), jnp.float32, -0.1, 0.1)

        a_hat = build_normalized_adjacency(edge_index, edge_weighs, N)

        # References (mirrored bf16 quantization + pure f32 spec).
        n_pad = max(128, ((N + 127) // 128) * 128)
        a_bf = jnp.pad(a_hat, ((0, n_pad - N), (0, n_pad - N))).astype(jnp.bfloat16)
        xw1_bf = jnp.pad(x * w1, ((0, n_pad - N), (0, 0))).astype(jnp.bfloat16)
        ref_m = reference_forward_mirrored(a_bf, xw1_bf, b1, w2, b2, wfc, bfc, N)
        ref_f = reference_forward_f32(a_hat, x, w1, b1, w2, b2, wfc, bfc)

        # Exercise both the fused (resident-A) and the streaming fallback path.
        for path in ("fused", "stream"):
            out = graphnet_forward(a_hat, x, w1, b1, w2, b2, wfc, bfc,
                                   force_path=path)
            out = jax.block_until_ready(out)
            assert out.shape == (N, 1)
            assert jnp.allclose(out, ref_m, atol=5e-3, rtol=5e-3), \
                f"{path} path mismatch vs mirrored ref (N={N})"
            assert jnp.allclose(out, ref_f, atol=5e-2, rtol=5e-2), \
                f"{path} path mismatch vs f32 ref (N={N})"

    print("KERNEL_OK")
</pallas_src>

<mosaic_0001>
module attributes {stable_mosaic.version = 11 : i64} {
  func.func @_fused_kernel(%arg0: i32, %arg1: i32, %arg2: memref<128x128xbf16, #tpu.memory_space<vmem>>, %arg3: memref<128x32xbf16, #tpu.memory_space<vmem>>, %arg4: memref<8x128xf32, #tpu.memory_space<vmem>>, %arg5: memref<16x32xbf16, #tpu.memory_space<vmem>>, %arg6: memref<1x128xf32, #tpu.memory_space<vmem>>, %arg7: memref<16x128xbf16, #tpu.memory_space<vmem>>) attributes {dimension_semantics = [#tpu.dimension_semantics<arbitrary>, #tpu.dimension_semantics<arbitrary>], iteration_bounds = array<i64: 2, 1>, scalar_prefetch = 0 : i64, scratch_operands = 1 : i64, tpu.core_type = #tpu.core_type<tc>, window_params = [{pipeline_mode = #tpu.pipeline_mode<synchronous>, transform_indices = @transform_0, window_bounds = array<i64: 128, 128>}, {pipeline_mode = #tpu.pipeline_mode<synchronous>, transform_indices = @transform_1, window_bounds = array<i64: 128, 32>}, {pipeline_mode = #tpu.pipeline_mode<synchronous>, transform_indices = @transform_2, window_bounds = array<i64: 8, 128>}, {pipeline_mode = #tpu.pipeline_mode<synchronous>, transform_indices = @transform_3, window_bounds = array<i64: 16, 32>}, {transform_indices = @transform_4, window_bounds = array<i64: 1, 128>}]} {
    %c128_i32 = arith.constant 128 : i32
    %0 = arith.muli %arg1, %c128_i32 : i32
    %1 = tpu.assume_multiple %0, 128 : i32
    %2 = arith.index_cast %1 : i32 to index
    %c0 = arith.constant 0 : index
    %3 = vector.load %arg2[%2, %c0] : memref<128x128xbf16, #tpu.memory_space<vmem>>, vector<128x128xbf16>
    %c0_i32 = arith.constant 0 : i32
    %4 = arith.cmpi eq, %arg0, %c0_i32 : i32
    %5 = arith.extui %4 : i1 to i32
    %c0_i32_0 = arith.constant 0 : i32
    %6 = arith.cmpi ne, %5, %c0_i32_0 : i32
    scf.if %6 {
      %c0_2 = arith.constant 0 : index
      %c0_3 = arith.constant 0 : index
      %10 = vector.load %arg3[%c0_2, %c0_3] : memref<128x32xbf16, #tpu.memory_space<vmem>>, vector<128x32xbf16>
      %cst = arith.constant dense<0.000000e+00> : vector<128x32xf32>
      %11 = tpu.matmul %3, %10, %cst {dimension_numbers = #tpu.dot_dimension_numbers<[1], [0], [0], [1], [0, 0, 1, 1], [], []>} : vector<128x128xbf16>, vector<128x32xbf16>, vector<128x32xf32> -> vector<128x32xf32>
      %c0_4 = arith.constant 0 : index
      %c0_5 = arith.constant 0 : index
      %12 = vector.load %arg4[%c0_4, %c0_5] : memref<8x128xf32, #tpu.memory_space<vmem>>, vector<1x32xf32>
      %13 = vector.broadcast %12 : vector<1x32xf32> to vector<128x32xf32>
      %14 = arith.addf %11, %13 : vector<128x32xf32>
      %cst_6 = arith.constant 0.000000e+00 : f32
      %15 = vector.broadcast %cst_6 : f32 to vector<128x32xf32>
      %16 = arith.maximumf %14, %15 : vector<128x32xf32>
      %17 = arith.truncf %16 : vector<128x32xf32> to vector<128x32xbf16>
      %c0_7 = arith.constant 0 : index
      %c0_8 = arith.constant 0 : index
      %18 = vector.load %arg5[%c0_7, %c0_8] : memref<16x32xbf16, #tpu.memory_space<vmem>>, vector<16x32xbf16>
      %cst_9 = arith.constant dense<0.000000e+00> : vector<16x128xf32>
      %19 = tpu.matmul %18, %17, %cst_9 {dimension_numbers = #tpu.dot_dimension_numbers<[1], [1], [0], [0], [0, 0, 1, 0], [], []>} : vector<16x32xbf16>, vector<128x32xbf16>, vector<16x128xf32> -> vector<16x128xf32>
      %20 = arith.truncf %19 : vector<16x128xf32> to vector<16x128xbf16>
      %c0_10 = arith.constant 0 : index
      %21 = arith.index_cast %1 : i32 to index
      %22 = vector.load %arg7[%c0_10, %21] : memref<16x128xbf16, #tpu.memory_space<vmem>>, vector<16x128xbf16>
      tpu.vector_store %arg7[%c0_10, %21], %20 {strides = array<i32>} : memref<16x128xbf16, #tpu.memory_space<vmem>>, vector<16x128xbf16>,
      %cst_11 = arith.constant 0.000000e+00 : f32
      %23 = vector.broadcast %cst_11 : f32 to vector<1x128xf32>
      %c0_12 = arith.constant 0 : index
      %c0_13 = arith.constant 0 : index
      %24 = vector.load %arg6[%c0_12, %c0_13] : memref<1x128xf32, #tpu.memory_space<vmem>>, vector<1x128xf32>
      tpu.vector_store %arg6[%c0_12, %c0_13], %23 {strides = array<i32>} : memref<1x128xf32, #tpu.memory_space<vmem>>, vector<1x128xf32>,
    } else {
    }
    %c1_i32 = arith.constant 1 : i32
    %7 = arith.cmpi eq, %arg0, %c1_i32 : i32
    %8 = arith.extui %7 : i1 to i32
    %c0_i32_1 = arith.constant 0 : i32
    %9 = arith.cmpi ne, %8, %c0_i32_1 : i32
    scf.if %9 {
      %c0_2 = arith.constant 0 : index
      %c0_3 = arith.constant 0 : index
      %10 = vector.load %arg7[%c0_2, %c0_3] : memref<16x128xbf16, #tpu.memory_space<vmem>>, vector<16x128xbf16>
      %cst = arith.constant dense<0.000000e+00> : vector<128x16xf32>
      %11 = tpu.matmul %3, %10, %cst {dimension_numbers = #tpu.dot_dimension_numbers<[1], [1], [0], [0], [0, 0, 1, 0], [], []>} : vector<128x128xbf16>, vector<16x128xbf16>, vector<128x16xf32> -> vector<128x16xf32>
      %c1 = arith.constant 1 : index
      %c0_4 = arith.constant 0 : index
      %12 = vector.load %arg4[%c1, %c0_4] : memref<8x128xf32, #tpu.memory_space<vmem>>, vector<1x16xf32>
      %13 = vector.broadcast %12 : vector<1x16xf32> to vector<128x16xf32>
      %14 = arith.addf %11, %13 : vector<128x16xf32>
      %cst_5 = arith.constant 0.000000e+00 : f32
      %15 = vector.broadcast %cst_5 : f32 to vector<128x16xf32>
      %16 = arith.maximumf %14, %15 : vector<128x16xf32>
      %c2 = arith.constant 2 : index
      %c0_6 = arith.constant 0 : index
      %17 = vector.load %arg4[%c2, %c0_6] : memref<8x128xf32, #tpu.memory_space<vmem>>, vector<1x16xf32>
      %c3 = arith.constant 3 : index
      %c0_7 = arith.constant 0 : index
      %18 = vector.load %arg4[%c3, %c0_7] : memref<8x128xf32, #tpu.memory_space<vmem>>, vector<1x1xf32>
      %cst_8 = arith.constant dense<0.000000e+00> : vector<1x128xf32>
      %19 = tpu.matmul %17, %16, %cst_8 {dimension_numbers = #tpu.dot_dimension_numbers<[1], [1], [0], [0], [0, 0, 1, 0], [], []>} : vector<1x16xf32>, vector<128x16xf32>, vector<1x128xf32> -> vector<1x128xf32>
      %20 = vector.broadcast %18 : vector<1x1xf32> to vector<1x128xf32>
      %21 = arith.addf %19, %20 : vector<1x128xf32>
      %c0_9 = arith.constant 0 : index
      %c0_10 = arith.constant 0 : index
      %22 = vector.load %arg6[%c0_9, %c0_10] : memref<1x128xf32, #tpu.memory_space<vmem>>, vector<1x128xf32>
      tpu.vector_store %arg6[%c0_9, %c0_10], %21 {strides = array<i32>} : memref<1x128xf32, #tpu.memory_space<vmem>>, vector<1x128xf32>,
    } else {
    }
    return
  }
  func.func @transform_0(%arg0: i32, %arg1: i32) -> (i32, i32) {
    %c0_i32 = arith.constant 0 : i32
    %c0_i32_0 = arith.constant 0 : i32
    %c0_i32_1 = arith.constant 0 : i32
    return %c0_i32, %c0_i32_0 : i32, i32
  }
  func.func @transform_1(%arg0: i32, %arg1: i32) -> (i32, i32) {
    %c0_i32 = arith.constant 0 : i32
    %c0_i32_0 = arith.constant 0 : i32
    %c0_i32_1 = arith.constant 0 : i32
    return %c0_i32, %c0_i32_0 : i32, i32
  }
  func.func @transform_2(%arg0: i32, %arg1: i32) -> (i32, i32) {
    %c0_i32 = arith.constant 0 : i32
    %c0_i32_0 = arith.constant 0 : i32
    %c0_i32_1 = arith.constant 0 : i32
    return %c0_i32, %c0_i32_0 : i32, i32
  }
  func.func @transform_3(%arg0: i32, %arg1: i32) -> (i32, i32) {
    %c0_i32 = arith.constant 0 : i32
    %c0_i32_0 = arith.constant 0 : i32
    %c0_i32_1 = arith.constant 0 : i32
    return %c0_i32, %c0_i32_0 : i32, i32
  }
  func.func @transform_4(%arg0: i32, %arg1: i32) -> (i32, i32) {
    %c0_i32 = arith.constant 0 : i32
    %c0_i32_0 = arith.constant 0 : i32
    return %c0_i32, %arg1 : i32, i32
  }
}

</mosaic_0001>

<llo_original>
// kernel: tpu_custom_call.1
$region0: #{tpu_custom_call.1}
  #allocation0 [shape = 'u32[]', space=smem, size = 0x4, offset = 0x4, fixed_abs, tag = 'smem constant byte address 0x4 - core index']
  #allocation1 [shape = 'u32[144,128]{1,0:T(1,128)}', space=vmem, size = 0x12000, scoped, tag = 'internal scratch']
  #allocation2 [shape = 'bf16[16,128]{1,0:T(8,128)(2,1)}', space=vmem, size = 0x1000, scoped, tag = 'scratch operand']
  %s0 = inlined_call_operand.vmem [shape: bf16[128,128], index: 0, kind: input, shape index: {}]
  %s1 = inlined_call_operand.vmem [shape: bf16[128,32], index: 1, kind: input, shape index: {}]
  %s2 = inlined_call_operand.vmem [shape: f32[8,128], index: 2, kind: input, shape index: {}]
  %s3 = inlined_call_operand.vmem [shape: bf16[16,32], index: 3, kind: input, shape index: {}]
  %s4 = inlined_call_operand.hbm [shape: f32[1,128], index: 4, kind: output, shape index: {}]
  %s5 = sld [smem:[#allocation0]]
  $region57: #{tpu_custom_call.1} parent=0
    _
  %s7 = ssub.s32 1, %s5
  %s8 = scalar_select 0, %s7, %s5
  $region1: #{tpu_custom_call.1} parent=0
    #allocation3 [shape = 'u8[512]{0}', space=vmem, size = 0x400, scoped, tag = 'output window, operand 0, single buffered']
    #allocation4 [shape = 's32[2]{0}', space=sflag, size = 0x8, scoped, tag = 'scoped memory for tpu_custom_call.1']
    %9 = vsyncpa [#allocation4], 0
    loop: start=0, step=1, limit=4
    $region2: #{tpu_custom_call.1} parent=1 // loop_pre_header
      _
    $region3: #{tpu_custom_call.1} parent=1 // loop_header
      %s11 = sphi 0, %s15
      %p12 = scmp.ge.s32.totalorder %s11, 4
      %s18 = sphi 0, %s30
      %s19 = sphi 0, %s26
      %s20 = sphi 0, %s18
      %s21 = sphi 0, %s19
      %s22 = sphi 0, %s20
      %s23 = sphi 0, %s21
      %s31 = sphi 0, %s31
      %s33 = sphi 0, %s31
      %s34 = sphi 0, %s33
      %s48 = sphi 0, %s34
      %s52 = sphi 0, %s52
      %s54 = sphi 0, %s52
      %s55 = sphi 0, %s54
      %s69 = sphi 0, %s55
      %s73 = sphi 0, %s73
      %s75 = sphi 0, %s73
      %s76 = sphi 0, %s75
      %s90 = sphi 0, %s76
      %s94 = sphi 0, %s94
      %s96 = sphi 0, %s94
      %s97 = sphi 0, %s96
      %s111 = sphi 0, %s97
      %s117 = sphi 0, %s119
      %s120 = sphi 0, %s117
      %s121 = sphi 0, %s120
      %s137 = sphi 0, %s121
    $region4: #{tpu_custom_call.1} parent=1 // loop_header_branch
      %14 = sbr.rel (%p12) target = $region8
    $region5: #{tpu_custom_call.1} parent=1 // loop_body
      %s16 = ssub.s32 %s11, 1
      %s17 = ssub.s32 %s11, 2
      %s24 = sadd.s32 1, %s19
      %p25 = scmp.ge.s32.totalorder %s24, 1
      %s26 = scalar_select %p25, 0, %s24
      %s27 = sadd.s32 1, %s18
      %s28 = scalar_select %p25, %s27, %s18
      %p29 = scmp.ge.s32.totalorder %s28, 2
      %s30 = scalar_select %p29, 0, %s28
      %s32 = sadd.s32 %s31, 1
      %p35 = scmp.eq.s32.totalorder %s11, 1
      %p36 = scmp.ne.s32.totalorder %s31, %s33
      %p37 = scmp.eq.s32.totalorder %s11, 0
      %p38 = por %p36, %p37
      %p39 = scmp.ne.s32.totalorder %s31, %s33
      %p40 = scmp.eq.s32.totalorder %s16, 1
      %p41 = por %p39, %p40
      %p42 = scmp.ne.s32.totalorder %s33, %s34
      %p43 = scmp.eq.s32.totalorder %s16, 0
      %p44 = por %p42, %p43
      %p45 = scmp.ne.s32.totalorder %s33, %s34
      %p46 = scmp.eq.s32.totalorder %s17, 1
      %p47 = por %p45, %p46
      %p49 = scmp.ne.s32.totalorder %s34, %s48
      %p50 = scmp.eq.s32.totalorder %s17, 0
      %p51 = por %p49, %p50
      %s53 = sadd.s32 %s52, 1
      %p56 = scmp.eq.s32.totalorder %s11, 1
      %p57 = scmp.ne.s32.totalorder %s52, %s54
      %p58 = scmp.eq.s32.totalorder %s11, 0
      %p59 = por %p57, %p58
      %p60 = scmp.ne.s32.totalorder %s52, %s54
      %p61 = scmp.eq.s32.totalorder %s16, 1
      %p62 = por %p60, %p61
      %p63 = scmp.ne.s32.totalorder %s54, %s55
      %p64 = scmp.eq.s32.totalorder %s16, 0
      %p65 = por %p63, %p64
      %p66 = scmp.ne.s32.totalorder %s54, %s55
      %p67 = scmp.eq.s32.totalorder %s17, 1
      %p68 = por %p66, %p67
      %p70 = scmp.ne.s32.totalorder %s55, %s69
      %p71 = scmp.eq.s32.totalorder %s17, 0
      %p72 = por %p70, %p71
      %s74 = sadd.s32 %s73, 1
      %p77 = scmp.eq.s32.totalorder %s11, 1
      %p78 = scmp.ne.s32.totalorder %s73, %s75
      %p79 = scmp.eq.s32.totalorder %s11, 0
      %p80 = por %p78, %p79
      %p81 = scmp.ne.s32.totalorder %s73, %s75
      %p82 = scmp.eq.s32.totalorder %s16, 1
      %p83 = por %p81, %p82
      %p84 = scmp.ne.s32.totalorder %s75, %s76
      %p85 = scmp.eq.s32.totalorder %s16, 0
      %p86 = por %p84, %p85
      %p87 = scmp.ne.s32.totalorder %s75, %s76
      %p88 = scmp.eq.s32.totalorder %s17, 1
      %p89 = por %p87, %p88
      %p91 = scmp.ne.s32.totalorder %s76, %s90
      %p92 = scmp.eq.s32.totalorder %s17, 0
      %p93 = por %p91, %p92
      %s95 = sadd.s32 %s94, 1
      %p98 = scmp.eq.s32.totalorder %s11, 1
      %p99 = scmp.ne.s32.totalorder %s94, %s96
      %p100 = scmp.eq.s32.totalorder %s11, 0
      %p101 = por %p99, %p100
      %p102 = scmp.ne.s32.totalorder %s94, %s96
      %p103 = scmp.eq.s32.totalorder %s16, 1
      %p104 = por %p102, %p103
      %p105 = scmp.ne.s32.totalorder %s96, %s97
      %p106 = scmp.eq.s32.totalorder %s16, 0
      %p107 = por %p105, %p106
      %p108 = scmp.ne.s32.totalorder %s96, %s97
      %p109 = scmp.eq.s32.totalorder %s17, 1
      %p110 = por %p108, %p109
      %p112 = scmp.ne.s32.totalorder %s97, %s111
      %p113 = scmp.eq.s32.totalorder %s17, 0
      %p114 = por %p112, %p113
      %s115 = ssub.s32 %s19, %s26
      %p116 = scmp.eq.s32.totalorder %s115, 0
      %s118 = sadd.s32 %s117, 1
      %s119 = scalar_select %p116, %s117, %s118
      %p122 = pneg %p116
      %p123 = scmp.eq.s32.totalorder %s11, 1
      %p124 = por %p122, %p123
      %p125 = scmp.ne.s32.totalorder %s117, %s120
      %p126 = scmp.eq.s32.totalorder %s11, 0
      %p127 = por %p125, %p126
      %p128 = scmp.ne.s32.totalorder %s117, %s120
      %p129 = scmp.eq.s32.totalorder %s16, 1
      %p130 = por %p128, %p129
      %p131 = scmp.ne.s32.totalorder %s120, %s121
      %p132 = scmp.eq.s32.totalorder %s16, 0
      %p133 = por %p131, %p132
      %p134 = scmp.ne.s32.totalorder %s120, %s121
      %p135 = scmp.eq.s32.totalorder %s17, 1
      %p136 = por %p134, %p135
      %p138 = scmp.ne.s32.totalorder %s121, %s137
      %p139 = scmp.eq.s32.totalorder %s17, 0
      %p140 = por %p138, %p139
      %p141 = scmp.le.s32.totalorder 1, %s11
      %p142 = scmp.lt.s32.totalorder %s11, 3
      %p143 = pnand %p141, %p142
      %p144 = pneg %p143
      // Predicated region
      $region9: #{tpu_custom_call.1} parent=5 // pred_check
        _
      $region10: #{tpu_custom_call.1} parent=5 // pred_check_branch
        %146 = sbr.rel (%p143) target = $region12
      $region11: #{tpu_custom_call.1} parent=5 // pred_region
        %s147 = ssub.s32 %s11, 1
        // Predicated region
        $region13: #{tpu_custom_call.1} parent=11 // pred_check
          %p148 = pneg %p44
        $region14: #{tpu_custom_call.1} parent=11 // pred_check_branch
          %150 = sbr.rel (%p148) target = $region16
        $region15: #{tpu_custom_call.1} parent=11 // pred_region
          _
        $region16: #{tpu_custom_call.1} parent=11 // pred_fallthru
          _
        // Predicated region
        $region17: #{tpu_custom_call.1} parent=11 // pred_check
          %p151 = pneg %p65
        $region18: #{tpu_custom_call.1} parent=11 // pred_check_branch
          %153 = sbr.rel (%p151) target = $region20
        $region19: #{tpu_custom_call.1} parent=11 // pred_region
          _
        $region20: #{tpu_custom_call.1} parent=11 // pred_fallthru
          _
        // Predicated region
        $region21: #{tpu_custom_call.1} parent=11 // pred_check
          %p154 = pneg %p86
        $region22: #{tpu_custom_call.1} parent=11 // pred_check_branch
          %156 = sbr.rel (%p154) target = $region24
        $region23: #{tpu_custom_call.1} parent=11 // pred_region
          _
        $region24: #{tpu_custom_call.1} parent=11 // pred_fallthru
          _
        // Predicated region
        $region25: #{tpu_custom_call.1} parent=11 // pred_check
          %p157 = pneg %p107
        $region26: #{tpu_custom_call.1} parent=11 // pred_check_branch
          %159 = sbr.rel (%p157) target = $region28
        $region27: #{tpu_custom_call.1} parent=11 // pred_region
          _
        $region28: #{tpu_custom_call.1} parent=11 // pred_fallthru
          _
      $region12: #{tpu_custom_call.1} parent=5 // pred_fallthru
        _
      %p160 = scmp.lt.s32.totalorder %s11, 2
      // Predicated region
      $region29: #{tpu_custom_call.1} parent=5 // pred_check
        %p161 = pneg %p160
      $region30: #{tpu_custom_call.1} parent=5 // pred_check_branch
        %163 = sbr.rel (%p161) target = $region32
      $region31: #{tpu_custom_call.1} parent=5 // pred_region
        _
      $region32: #{tpu_custom_call.1} parent=5 // pred_fallthru
        _
      %p164 = scmp.le.s32.totalorder 1, %s11
      %p165 = scmp.lt.s32.totalorder %s11, 3
      %p166 = pnand %p164, %p165
      %p167 = pneg %p166
      // Predicated region
      $region33: #{tpu_custom_call.1} parent=5 // pred_check
        _
      $region34: #{tpu_custom_call.1} parent=5 // pred_check_branch
        %169 = sbr.rel (%p166) target = $region36
      $region35: #{tpu_custom_call.1} parent=5 // pred_region
        %s170 = ssub.s32 %s11, 1
        %p171 = pneg %p44
        %p172 = pneg %p41
        %p173 = pneg %p65
        %p174 = pneg %p62
        %p175 = pneg %p86
        %p176 = pneg %p83
        %p177 = pneg %p107
        %p178 = pneg %p104
        %p179 = pneg %p133
        %p180 = pneg %p130
        %s182 = smul.u32 %s21, 128
        %s183 = sshra.s32 %s182, 3
        %s184 = sand.u32 %s182, 7
        %s185 = smul.addr %s183, 4
        %s186 = scalar_lea.vmem %s0, %s185
        %v187 = vld [vmem:[%s186] sm:$0xf]
        %v188 = vld [vmem:[%s186 + $0x4] sm:$0xf]
        %v189 = vld [vmem:[%s186 + $0x8] sm:$0xf]
        %v190 = vld [vmem:[%s186 + $0xc] sm:$0xf]
        %v191 = vld [vmem:[%s186 + $0x10] sm:$0xf]
        %v192 = vld [vmem:[%s186 + $0x14] sm:$0xf]
        %v193 = vld [vmem:[%s186 + $0x18] sm:$0xf]
        %v194 = vld [vmem:[%s186 + $0x1c] sm:$0xf]
        %v195 = vld [vmem:[%s186 + $0x20] sm:$0xf]
        %v196 = vld [vmem:[%s186 + $0x24] sm:$0xf]
        %v197 = vld [vmem:[%s186 + $0x28] sm:$0xf]
        %v198 = vld [vmem:[%s186 + $0x2c] sm:$0xf]
        %v199 = vld [vmem:[%s186 + $0x30] sm:$0xf]
        %v200 = vld [vmem:[%s186 + $0x34] sm:$0xf]
        %v201 = vld [vmem:[%s186 + $0x38] sm:$0xf]
        %v202 = vld [vmem:[%s186 + $0x3c] sm:$0xf]
        %p203 = scmp.eq.s32.totalorder %s20, 0
        // Predicated region
        $region37: #{tpu_custom_call.1} parent=35 // pred_check
          %p204 = pneg %p203
        $region38: #{tpu_custom_call.1} parent=35 // pred_check_branch
          %206 = sbr.rel (%p204) target = $region40
        $region39: #{tpu_custom_call.1} parent=35 // pred_region
          %v207 = vld [vmem:[%s1] sm:$0xf]
          %v208 = vld [vmem:[%s1 + $0x4] sm:$0xf]
          %v209 = vld [vmem:[%s1 + $0x8] sm:$0xf]
          %v210 = vld [vmem:[%s1 + $0xc] sm:$0xf]
          %v211 = vld [vmem:[%s1 + $0x10] sm:$0xf]
          %v212 = vld [vmem:[%s1 + $0x14] sm:$0xf]
          %v213 = vld [vmem:[%s1 + $0x18] sm:$0xf]
          %v214 = vld [vmem:[%s1 + $0x1c] sm:$0xf]
          %v215 = vld [vmem:[%s1 + $0x20] sm:$0xf]
          %v216 = vld [vmem:[%s1 + $0x24] sm:$0xf]
          %v217 = vld [vmem:[%s1 + $0x28] sm:$0xf]
          %v218 = vld [vmem:[%s1 + $0x2c] sm:$0xf]
          %v219 = vld [vmem:[%s1 + $0x30] sm:$0xf]
          %v220 = vld [vmem:[%s1 + $0x34] sm:$0xf]
          %v221 = vld [vmem:[%s1 + $0x38] sm:$0xf]
          %v222 = vld [vmem:[%s1 + $0x3c] sm:$0xf]
          %v223 = vld [vmem:[%s2] sm:$0x1]
          %v224 = vlaneseq
          %v225 = vshrl.u32 %v224, 7
          %v226 = vsub.s32 0, %v225
          %v227 = vrot.slane %v223, %v226
          %v244 = vunpack.c.l.b16 %v187
          %v245 = vunpack.c.l.b16 %v188
          %v246 = vunpack.c.l.b16 %v189
          %v247 = vunpack.c.l.b16 %v190
          %v248 = vunpack.c.l.b16 %v191
          %v249 = vunpack.c.l.b16 %v192
          %v250 = vunpack.c.l.b16 %v193
          %v251 = vunpack.c.l.b16 %v194
          %v252 = vunpack.c.l.b16 %v195
          %v253 = vunpack.c.l.b16 %v196
          %v254 = vunpack.c.l.b16 %v197
          %v255 = vunpack.c.l.b16 %v198
          %v256 = vunpack.c.l.b16 %v199
          %v257 = vunpack.c.l.b16 %v200
          %v258 = vunpack.c.l.b16 %v201
          %v259 = vunpack.c.l.b16 %v202
          %v260 = vpack.c.b16 %v245, %v244
          %v261 = vpack.c.b16 %v247, %v246
          %v262 = vpack.c.b16 %v249, %v248
          %v263 = vpack.c.b16 %v251, %v250
          %v264 = vpack.c.b16 %v253, %v252
          %v265 = vpack.c.b16 %v255, %v254
          %v266 = vpack.c.b16 %v257, %v256
          %v267 = vpack.c.b16 %v259, %v258
          %v292 = vunpack.c.l.b16 %v207
          %v293 = vunpack.c.l.b16 %v208
          %v294 = vunpack.c.l.b16 %v209
          %v295 = vunpack.c.l.b16 %v210
          %v296 = vunpack.c.l.b16 %v211
          %v297 = vunpack.c.l.b16 %v212
          %v298 = vunpack.c.l.b16 %v213
          %v299 = vunpack.c.l.b16 %v214
          %v300 = vunpack.c.l.b16 %v215
          %v301 = vunpack.c.l.b16 %v216
          %v302 = vunpack.c.l.b16 %v217
          %v303 = vunpack.c.l.b16 %v218
          %v304 = vunpack.c.l.b16 %v219
          %v305 = vunpack.c.l.b16 %v220
          %v306 = vunpack.c.l.b16 %v221
          %v307 = vunpack.c.l.b16 %v222
          %v308 = vpack.c.b16 %v293, %v292
          %v309 = vpack.c.b16 %v295, %v294
          %v310 = vpack.c.b16 %v297, %v296
          %v311 = vpack.c.b16 %v299, %v298
          %v312 = vpack.c.b16 %v301, %v300
          %v313 = vpack.c.b16 %v303, %v302
          %v314 = vpack.c.b16 %v305, %v304
          %v315 = vpack.c.b16 %v307, %v306
          %324 = vmatprep.subr.bf16.mxu0 0
          %325 = vmatpush1.bf16.msra.mxu0 %v315
          %326 = vmatprep.subr.bf16.mxu0 0
          %327 = vmatpush1.bf16.msra.mxu0 %v314
          %328 = vmatprep.subr.bf16.mxu0 0
          %329 = vmatpush1.bf16.msra.mxu0 %v313
          %330 = vmatprep.subr.bf16.mxu0 0
          %331 = vmatpush1.bf16.msra.mxu0 %v312
          %332 = vmatprep.subr.bf16.mxu0 0
          %333 = vmatpush1.bf16.msra.mxu0 %v311
          %334 = vmatprep.subr.bf16.mxu0 0
          %335 = vmatpush1.bf16.msra.mxu0 %v310
          %336 = vmatprep.subr.bf16.mxu0 0
          %337 = vmatpush1.bf16.msra.mxu0 %v309
          %338 = vmatprep.subr.bf16.mxu0 0
          %339 = vmatpush1.bf16.msra.mxu0 %v308
          %340 = vmatprep.subr.bf16.mxu0 0
          %341 = vmatpush2.bf16.msra.mxu0 0
          %342 = vmatprep.subr.bf16.mxu0 0
          %343 = vmatpush2.bf16.msra.mxu0 0
          %344 = vmatprep.subr.bf16.mxu0 0
          %345 = vmatpush2.bf16.msra.mxu0 0
          %346 = vmatprep.subr.bf16.mxu0 0
          %347 = vmatpush2.bf16.msra.mxu0 0
          %348 = vmatprep.subr.bf16.mxu0 0
          %349 = vmatpush2.bf16.msra.mxu0 0
          %350 = vmatprep.subr.bf16.mxu0 0
          %351 = vmatpush2.bf16.msra.mxu0 0
          %352 = vmatprep.subr.bf16.mxu0 0
          %353 = vmatpush2.bf16.msra.mxu0 0
          %354 = vmatprep.subr.bf16.mxu0 0
          %355 = vmatpush2.bf16.msra.mxu0 0
          %356 = vmatprep.mubr.bf16.mxu0 0
          %357 = vmatmul.mubr.bf16.gmra.mxu0 %v260
          %v358 = vpop.f32.mrf.mxu0
          %v359 = vadd.f32 %v227, %v358
          %v360 = vpop.f32.mrf.mxu0
          %v361 = vpop.f32.mrf.mxu0
          %v362 = vadd.f32 %v227, %v361
          %v363 = vpop.f32.mrf.mxu0
          %364 = vmatprep.mubr.bf16.mxu0 0
          %365 = vmatmul.mubr.bf16.gmra.mxu0 %v261
          %v366 = vpop.f32.mrf.mxu0
          %v367 = vadd.f32 %v227, %v366
          %v368 = vpop.f32.mrf.mxu0
          %v369 = vpop.f32.mrf.mxu0
          %v370 = vadd.f32 %v227, %v369
          %v371 = vpop.f32.mrf.mxu0
          %372 = vmatprep.mubr.bf16.mxu0 0
          %373 = vmatmul.mubr.bf16.gmra.mxu0 %v262
          %v374 = vpop.f32.mrf.mxu0
          %v375 = vadd.f32 %v227, %v374
          %v376 = vpop.f32.mrf.mxu0
          %v377 = vpop.f32.mrf.mxu0
          %v378 = vadd.f32 %v227, %v377
          %v379 = vpop.f32.mrf.mxu0
          %380 = vmatprep.mubr.bf16.mxu0 0
          %381 = vmatmul.mubr.bf16.gmra.mxu0 %v263
          %v382 = vpop.f32.mrf.mxu0
          %v383 = vadd.f32 %v227, %v382
          %v384 = vpop.f32.mrf.mxu0
          %v385 = vpop.f32.mrf.mxu0
          %v386 = vadd.f32 %v227, %v385
          %v387 = vpop.f32.mrf.mxu0
          %388 = vmatprep.mubr.bf16.mxu0 0
          %389 = vmatmul.mubr.bf16.gmra.mxu0 %v264
          %v390 = vpop.f32.mrf.mxu0
          %v391 = vadd.f32 %v227, %v390
          %v392 = vpop.f32.mrf.mxu0
          %v393 = vpop.f32.mrf.mxu0
          %v394 = vadd.f32 %v227, %v393
          %v395 = vpop.f32.mrf.mxu0
          %396 = vmatprep.mubr.bf16.mxu0 0
          %397 = vmatmul.mubr.bf16.gmra.mxu0 %v265
          %v398 = vpop.f32.mrf.mxu0
          %v399 = vadd.f32 %v227, %v398
          %v400 = vpop.f32.mrf.mxu0
          %v401 = vpop.f32.mrf.mxu0
          %v402 = vadd.f32 %v227, %v401
          %v403 = vpop.f32.mrf.mxu0
          %404 = vmatprep.mubr.bf16.mxu0 0
          %405 = vmatmul.mubr.bf16.gmra.mxu0 %v266
          %v406 = vpop.f32.mrf.mxu0
          %v407 = vadd.f32 %v227, %v406
          %v408 = vpop.f32.mrf.mxu0
          %v409 = vpop.f32.mrf.mxu0
          %v410 = vadd.f32 %v227, %v409
          %v411 = vpop.f32.mrf.mxu0
          %412 = vmatprep.mubr.bf16.mxu0 0
          %413 = vmatmul.mubr.bf16.gmra.mxu0 %v267
          %v414 = vpop.f32.mrf.mxu0
          %v415 = vadd.f32 %v227, %v414
          %v416 = vpop.f32.mrf.mxu0
          %v417 = vpop.f32.mrf.mxu0
          %v418 = vadd.f32 %v227, %v417
          %v419 = vpop.f32.mrf.mxu0
          %420 = vdwg.mxu0
          %v421 = vmax.f32 %v359, 0.0
          %v422 = vmax.f32 %v362, 0.0
          %v423 = vmax.f32 %v367, 0.0
          %v424 = vmax.f32 %v370, 0.0
          %v425 = vmax.f32 %v375, 0.0
          %v426 = vmax.f32 %v378, 0.0
          %v427 = vmax.f32 %v383, 0.0
          %v428 = vmax.f32 %v386, 0.0
          %v429 = vmax.f32 %v391, 0.0
          %v430 = vmax.f32 %v394, 0.0
          %v431 = vmax.f32 %v399, 0.0
          %v432 = vmax.f32 %v402, 0.0
          %v433 = vmax.f32 %v407, 0.0
          %v434 = vmax.f32 %v410, 0.0
          %v435 = vmax.f32 %v415, 0.0
          %v436 = vmax.f32 %v418, 0.0
          %v437 = vpack.c.bf16 %v422, %v421
          %v438 = vpack.c.bf16 %v424, %v423
          %v439 = vpack.c.bf16 %v426, %v425
          %v440 = vpack.c.bf16 %v428, %v427
          %v441 = vpack.c.bf16 %v430, %v429
          %v442 = vpack.c.bf16 %v432, %v431
          %v443 = vpack.c.bf16 %v434, %v433
          %v444 = vpack.c.bf16 %v436, %v435
          %v445 = vld [vmem:[%s3] sm:$0xf]
          %v446 = vld [vmem:[%s3 + $0x4] sm:$0xf]
          %v449 = vunpack.c.l.b16 %v445
          %v450 = vunpack.c.l.b16 %v446
          %v451 = vpack.c.b16 %v450, %v449
          %vm452 = vcmask 261120
          %v454 = vsel %vm452, %v451, 0
          %v457 = vsel %vm452, %v437, 0
          %v460 = vsel %vm452, %v438, 0
          %v463 = vsel %vm452, %v439, 0
          %v466 = vsel %vm452, %v440, 0
          %v469 = vsel %vm452, %v441, 0
          %v472 = vsel %vm452, %v442, 0
          %v475 = vsel %vm452, %v443, 0
          %v478 = vsel %vm452, %v444, 0
          %480 = vmatprep.subr.bf16.mxu0 0
          %481 = vmatpush1.bf16.xpose.msra.mxu0 %v478
          %482 = vmatprep.subr.bf16.mxu0 0
          %483 = vmatpush1.bf16.xpose.msra.mxu0 %v475
          %484 = vmatprep.subr.bf16.mxu0 0
          %485 = vmatpush1.bf16.xpose.msra.mxu0 %v472
          %486 = vmatprep.subr.bf16.mxu0 0
          %487 = vmatpush1.bf16.xpose.msra.mxu0 %v469
          %488 = vmatprep.subr.bf16.mxu0 0
          %489 = vmatpush1.bf16.xpose.msra.mxu0 %v466
          %490 = vmatprep.subr.bf16.mxu0 0
          %491 = vmatpush1.bf16.xpose.msra.mxu0 %v463
          %492 = vmatprep.subr.bf16.mxu0 0
          %493 = vmatpush1.bf16.xpose.msra.mxu0 %v460
          %494 = vmatprep.subr.bf16.mxu0 0
          %495 = vmatpush1.bf16.xpose.msra.mxu0 %v457
          %496 = vmatprep.subr.bf16.mxu0 0
          %497 = vmatpush2.bf16.xpose.msra.mxu0 0
          %498 = vmatprep.subr.bf16.mxu0 0
          %499 = vmatpush2.bf16.xpose.msra.mxu0 0
          %500 = vmatprep.subr.bf16.mxu0 0
          %501 = vmatpush2.bf16.xpose.msra.mxu0 0
          %502 = vmatprep.subr.bf16.mxu0 0
          %503 = vmatpush2.bf16.xpose.msra.mxu0 0
          %504 = vmatprep.subr.bf16.mxu0 0
          %505 = vmatpush2.bf16.xpose.msra.mxu0 0
          %506 = vmatprep.subr.bf16.mxu0 0
          %507 = vmatpush2.bf16.xpose.msra.mxu0 0
          %508 = vmatprep.subr.bf16.mxu0 0
          %509 = vmatpush2.bf16.xpose.msra.mxu0 0
          %510 = vmatprep.subr.bf16.mxu0 0
          %511 = vmatpush2.bf16.xpose.msra.mxu0 0
          %512 = vmatprep.mubr.bf16.mxu0 0
          %513 = vmatmul.mubr.bf16.gmra.mxu0 %v454
          %v514 = vpop.f32.mrf.mxu0
          %v515 = vadd.f32 0.0, %v514
          %v516 = vpop.f32.mrf.mxu0
          %v517 = vpop.f32.mrf.mxu0
          %v518 = vadd.f32 0.0, %v517
          %v519 = vpop.f32.mrf.mxu0
          %520 = vdwg.mxu0
          %v521 = vpack.c.bf16 %v518, %v515
          %v523 = vunpack.c.l.b16 %v521
          %v524 = vunpack.c.h.b16 %v521
          %v525 = vpack.c.b16 %v523, %v523
          %v526 = vpack.c.b16 %v524, %v524
          %s529 = sshra.s32 %s182, 7
          %s530 = sand.u32 %s182, 127
          %s531 = smul.addr %s529, 4
          %s532 = scalar_lea.vmem [#allocation2], %s531
          %533 = vst [vmem:[%s532] sm:$0xf] %v525
          %534 = vst [vmem:[%s532 + $0x4] sm:$0xf] %v526
          %535 = vst [vmem:[#allocation3] sm:$0x1] 0.0
        $region40: #{tpu_custom_call.1} parent=35 // pred_fallthru
          _
        %p536 = scmp.eq.s32.totalorder %s20, 1
        // Predicated region
        $region41: #{tpu_custom_call.1} parent=35 // pred_check
          %p537 = pneg %p536
        $region42: #{tpu_custom_call.1} parent=35 // pred_check_branch
          %539 = sbr.rel (%p537) target = $region44
        $region43: #{tpu_custom_call.1} parent=35 // pred_region
          %v540 = vld [vmem:[#allocation2] sm:$0xf]
          %v541 = vld [vmem:[#allocation2 + $0x4] sm:$0xf]
          %v542 = vld [vmem:[%s2 + $0x1] sm:$0x1]
          %v543 = vlaneseq
          %v544 = vshrl.u32 %v543, 7
          %v545 = vsub.s32 0, %v544
          %v546 = vrot.slane %v542, %v545
          %v563 = vunpack.c.l.b16 %v187
          %v564 = vunpack.c.l.b16 %v188
          %v565 = vunpack.c.l.b16 %v189
          %v566 = vunpack.c.l.b16 %v190
          %v567 = vunpack.c.l.b16 %v191
          %v568 = vunpack.c.l.b16 %v192
          %v569 = vunpack.c.l.b16 %v193
          %v570 = vunpack.c.l.b16 %v194
          %v571 = vunpack.c.l.b16 %v195
          %v572 = vunpack.c.l.b16 %v196
          %v573 = vunpack.c.l.b16 %v197
          %v574 = vunpack.c.l.b16 %v198
          %v575 = vunpack.c.l.b16 %v199
          %v576 = vunpack.c.l.b16 %v200
          %v577 = vunpack.c.l.b16 %v201
          %v578 = vunpack.c.l.b16 %v202
          %v579 = vpack.c.b16 %v564, %v563
          %v580 = vpack.c.b16 %v566, %v565
          %v581 = vpack.c.b16 %v568, %v567
          %v582 = vpack.c.b16 %v570, %v569
          %v583 = vpack.c.b16 %v572, %v571
          %v584 = vpack.c.b16 %v574, %v573
          %v585 = vpack.c.b16 %v576, %v575
          %v586 = vpack.c.b16 %v578, %v577
          %v597 = vunpack.c.l.b16 %v540
          %v598 = vunpack.c.l.b16 %v541
          %v599 = vpack.c.b16 %v598, %v597
          %601 = vmatprep.subr.bf16.mxu0 0
          %602 = vmatpush1.bf16.xpose.msra.mxu0 0
          %603 = vmatprep.subr.bf16.mxu0 0
          %604 = vmatpush1.bf16.xpose.msra.mxu0 0
          %605 = vmatprep.subr.bf16.mxu0 0
          %606 = vmatpush1.bf16.xpose.msra.mxu0 0
          %607 = vmatprep.subr.bf16.mxu0 0
          %608 = vmatpush1.bf16.xpose.msra.mxu0 0
          %609 = vmatprep.subr.bf16.mxu0 0
          %610 = vmatpush1.bf16.xpose.msra.mxu0 0
          %611 = vmatprep.subr.bf16.mxu0 0
          %612 = vmatpush1.bf16.xpose.msra.mxu0 0
          %613 = vmatprep.subr.bf16.mxu0 0
          %614 = vmatpush1.bf16.xpose.msra.mxu0 0
          %615 = vmatprep.subr.bf16.mxu0 0
          %616 = vmatpush1.bf16.xpose.msra.mxu0 %v599
          %617 = vmatprep.subr.bf16.mxu0 0
          %618 = vmatpush2.bf16.xpose.msra.mxu0 0
          %619 = vmatprep.subr.bf16.mxu0 0
          %620 = vmatpush2.bf16.xpose.msra.mxu0 0
          %621 = vmatprep.subr.bf16.mxu0 0
          %622 = vmatpush2.bf16.xpose.msra.mxu0 0
          %623 = vmatprep.subr.bf16.mxu0 0
          %624 = vmatpush2.bf16.xpose.msra.mxu0 0
          %625 = vmatprep.subr.bf16.mxu0 0
          %626 = vmatpush2.bf16.xpose.msra.mxu0 0
          %627 = vmatprep.subr.bf16.mxu0 0
          %628 = vmatpush2.bf16.xpose.msra.mxu0 0
          %629 = vmatprep.subr.bf16.mxu0 0
          %630 = vmatpush2.bf16.xpose.msra.mxu0 0
          %631 = vmatprep.subr.bf16.mxu0 0
          %632 = vmatpush2.bf16.xpose.msra.mxu0 0
          %633 = vmatprep.mubr.bf16.mxu0 0
          %634 = vmatmul.mubr.bf16.gmra.mxu0 %v579
          %v635 = vpop.f32.mrf.mxu0
          %v636 = vadd.f32 %v546, %v635
          %v637 = vpop.f32.mrf.mxu0
          %v638 = vpop.f32.mrf.mxu0
          %v639 = vadd.f32 %v546, %v638
          %v640 = vpop.f32.mrf.mxu0
          %641 = vmatprep.mubr.bf16.mxu0 0
          %642 = vmatmul.mubr.bf16.gmra.mxu0 %v580
          %v643 = vpop.f32.mrf.mxu0
          %v644 = vadd.f32 %v546, %v643
          %v645 = vpop.f32.mrf.mxu0
          %v646 = vpop.f32.mrf.mxu0
          %v647 = vadd.f32 %v546, %v646
          %v648 = vpop.f32.mrf.mxu0
          %649 = vmatprep.mubr.bf16.mxu0 0
          %650 = vmatmul.mubr.bf16.gmra.mxu0 %v581
          %v651 = vpop.f32.mrf.mxu0
          %v652 = vadd.f32 %v546, %v651
          %v653 = vpop.f32.mrf.mxu0
          %v654 = vpop.f32.mrf.mxu0
          %v655 = vadd.f32 %v546, %v654
          %v656 = vpop.f32.mrf.mxu0
          %657 = vmatprep.mubr.bf16.mxu0 0
          %658 = vmatmul.mubr.bf16.gmra.mxu0 %v582
          %v659 = vpop.f32.mrf.mxu0
          %v660 = vadd.f32 %v546, %v659
          %v661 = vpop.f32.mrf.mxu0
          %v662 = vpop.f32.mrf.mxu0
          %v663 = vadd.f32 %v546, %v662
          %v664 = vpop.f32.mrf.mxu0
          %665 = vmatprep.mubr.bf16.mxu0 0
          %666 = vmatmul.mubr.bf16.gmra.mxu0 %v583
          %v667 = vpop.f32.mrf.mxu0
          %v668 = vadd.f32 %v546, %v667
          %v669 = vpop.f32.mrf.mxu0
          %v670 = vpop.f32.mrf.mxu0
          %v671 = vadd.f32 %v546, %v670
          %v672 = vpop.f32.mrf.mxu0
          %673 = vmatprep.mubr.bf16.mxu0 0
          %674 = vmatmul.mubr.bf16.gmra.mxu0 %v584
          %v675 = vpop.f32.mrf.mxu0
          %v676 = vadd.f32 %v546, %v675
          %v677 = vpop.f32.mrf.mxu0
          %v678 = vpop.f32.mrf.mxu0
          %v679 = vadd.f32 %v546, %v678
          %v680 = vpop.f32.mrf.mxu0
          %681 = vmatprep.mubr.bf16.mxu0 0
          %682 = vmatmul.mubr.bf16.gmra.mxu0 %v585
          %v683 = vpop.f32.mrf.mxu0
          %v684 = vadd.f32 %v546, %v683
          %v685 = vpop.f32.mrf.mxu0
          %v686 = vpop.f32.mrf.mxu0
          %v687 = vadd.f32 %v546, %v686
          %v688 = vpop.f32.mrf.mxu0
          %689 = vmatprep.mubr.bf16.mxu0 0
          %690 = vmatmul.mubr.bf16.gmra.mxu0 %v586
          %v691 = vpop.f32.mrf.mxu0
          %v692 = vadd.f32 %v546, %v691
          %v693 = vpop.f32.mrf.mxu0
          %v694 = vpop.f32.mrf.mxu0
          %v695 = vadd.f32 %v546, %v694
          %v696 = vpop.f32.mrf.mxu0
          %697 = vdwg.mxu0
          %v698 = vmax.f32 %v636, 0.0
          %v699 = vmax.f32 %v639, 0.0
          %v700 = vmax.f32 %v644, 0.0
          %v701 = vmax.f32 %v647, 0.0
          %v702 = vmax.f32 %v652, 0.0
          %v703 = vmax.f32 %v655, 0.0
          %v704 = vmax.f32 %v660, 0.0
          %v705 = vmax.f32 %v663, 0.0
          %v706 = vmax.f32 %v668, 0.0
          %v707 = vmax.f32 %v671, 0.0
          %v708 = vmax.f32 %v676, 0.0
          %v709 = vmax.f32 %v679, 0.0
          %v710 = vmax.f32 %v684, 0.0
          %v711 = vmax.f32 %v687, 0.0
          %v712 = vmax.f32 %v692, 0.0
          %v713 = vmax.f32 %v695, 0.0
          %v714 = vld [vmem:[%s2 + $0x2] sm:$0x1]
          %v715 = vld [vmem:[%s2 + $0x3] sm:$0x1]
          %717 = vset.pattern.permute.xlu0 0
          %718 = vperm.xlu0 %717, %v715
          %v719 = vpop.permute.xlu0 %718
          %vm721 = vcmask 130048
          %v723 = vsel %vm721, %v714, 0
          %v726 = vsel %vm721, %v698, 0
          %v729 = vsel %vm721, %v699, 0
          %v732 = vsel %vm721, %v700, 0
          %v735 = vsel %vm721, %v701, 0
          %v738 = vsel %vm721, %v702, 0
          %v741 = vsel %vm721, %v703, 0
          %v744 = vsel %vm721, %v704, 0
          %v747 = vsel %vm721, %v705, 0
          %v750 = vsel %vm721, %v706, 0
          %v753 = vsel %vm721, %v707, 0
          %v756 = vsel %vm721, %v708, 0
          %v759 = vsel %vm721, %v709, 0
          %v762 = vsel %vm721, %v710, 0
          %v765 = vsel %vm721, %v711, 0
          %v768 = vsel %vm721, %v712, 0
          %v771 = vsel %vm721, %v713, 0
          %773 = vmatprep.subr.mxu0 0.0
          %774 = vmatpush1.xpose.msra.mxu0 %v771
          %775 = vmatprep.subr.mxu0 0.0
          %776 = vmatpush1.xpose.msra.mxu0 %v768
          %777 = vmatprep.subr.mxu0 0.0
          %778 = vmatpush1.xpose.msra.mxu0 %v765
          %779 = vmatprep.subr.mxu0 0.0
          %780 = vmatpush1.xpose.msra.mxu0 %v762
          %781 = vmatprep.subr.mxu0 0.0
          %782 = vmatpush1.xpose.msra.mxu0 %v759
          %783 = vmatprep.subr.mxu0 0.0
          %784 = vmatpush1.xpose.msra.mxu0 %v756
          %785 = vmatprep.subr.mxu0 0.0
          %786 = vmatpush1.xpose.msra.mxu0 %v753
          %787 = vmatprep.subr.mxu0 0.0
          %788 = vmatpush1.xpose.msra.mxu0 %v750
          %789 = vmatprep.subr.mxu0 0.0
          %790 = vmatpush1.xpose.msra.mxu0 %v747
          %791 = vmatprep.subr.mxu0 0.0
          %792 = vmatpush1.xpose.msra.mxu0 %v744
          %793 = vmatprep.subr.mxu0 0.0
          %794 = vmatpush1.xpose.msra.mxu0 %v741
          %795 = vmatprep.subr.mxu0 0.0
          %796 = vmatpush1.xpose.msra.mxu0 %v738
          %797 = vmatprep.subr.mxu0 0.0
          %798 = vmatpush1.xpose.msra.mxu0 %v735
          %799 = vmatprep.subr.mxu0 0.0
          %800 = vmatpush1.xpose.msra.mxu0 %v732
          %801 = vmatprep.subr.mxu0 0.0
          %802 = vmatpush1.xpose.msra.mxu0 %v729
          %803 = vmatprep.subr.mxu0 0.0
          %804 = vmatpush1.xpose.msra.mxu0 %v726
          %805 = vmatprep.subr.mxu0 0.0
          %806 = vmatpush2.xpose.msra.mxu0 0.0
          %807 = vmatprep.subr.mxu0 0.0
          %808 = vmatpush2.xpose.msra.mxu0 0.0
          %809 = vmatprep.subr.mxu0 0.0
          %810 = vmatpush2.xpose.msra.mxu0 0.0
          %811 = vmatprep.subr.mxu0 0.0
          %812 = vmatpush2.xpose.msra.mxu0 0.0
          %813 = vmatprep.subr.mxu0 0.0
          %814 = vmatpush2.xpose.msra.mxu0 0.0
          %815 = vmatprep.subr.mxu0 0.0
          %816 = vmatpush2.xpose.msra.mxu0 0.0
          %817 = vmatprep.subr.mxu0 0.0
          %818 = vmatpush2.xpose.msra.mxu0 0.0
          %819 = vmatprep.subr.mxu0 0.0
          %820 = vmatpush2.xpose.msra.mxu0 0.0
          %821 = vmatprep.subr.mxu0 0.0
          %822 = vmatpush2.xpose.msra.mxu0 0.0
          %823 = vmatprep.subr.mxu0 0.0
          %824 = vmatpush2.xpose.msra.mxu0 0.0
          %825 = vmatprep.subr.mxu0 0.0
          %826 = vmatpush2.xpose.msra.mxu0 0.0
          %827 = vmatprep.subr.mxu0 0.0
          %828 = vmatpush2.xpose.msra.mxu0 0.0
          %829 = vmatprep.subr.mxu0 0.0
          %830 = vmatpush2.xpose.msra.mxu0 0.0
          %831 = vmatprep.subr.mxu0 0.0
          %832 = vmatpush2.xpose.msra.mxu0 0.0
          %833 = vmatprep.subr.mxu0 0.0
          %834 = vmatpush2.xpose.msra.mxu0 0.0
          %835 = vmatprep.subr.mxu0 0.0
          %836 = vmatpush2.xpose.msra.mxu0 0.0
          %837 = vmatprep.mubr.f32.mxu0 0.0
          %838 = vmatmul.mubr.f32.gmra.mxu0 %v723
          %v839 = vpop.f32.mrf.mxu0
          %v840 = vadd.f32 %v719, %v839
          %v841 = vpop.f32.mrf.mxu0
          %842 = vdwg.mxu0
          %843 = vst [vmem:[#allocation3] sm:$0x1] %v840
        $region44: #{tpu_custom_call.1} parent=35 // pred_fallthru
          _
        // Predicated region
        $region45: #{tpu_custom_call.1} parent=35 // pred_check
          %p844 = pneg %p130
        $region46: #{tpu_custom_call.1} parent=35 // pred_check_branch
          %846 = sbr.rel (%p844) target = $region48
        $region47: #{tpu_custom_call.1} parent=35 // pred_region
          %s848 = ssub.s32 16, 16
          %849 = vsyncadd [#allocation4], %s848
          %s850 = smul.addr %s21, 16
          %s851 = scalar_lea.hbm %s4, %s850
          %s853 = sshll.u32 [#allocation3], 4
          %s854 = int_to_ptr.vmem [resolvable:$true] %s853
          %856 = dma.vmem_to_hbm [thread:$0]  %s854, 16, %s851, [#allocation4]
        $region48: #{tpu_custom_call.1} parent=35 // pred_fallthru
          _
        // Predicated region
        $region49: #{tpu_custom_call.1} parent=35 // pred_check
          %p857 = pneg %p130
        $region50: #{tpu_custom_call.1} parent=35 // pred_check_branch
          %859 = sbr.rel (%p857) target = $region52
        $region51: #{tpu_custom_call.1} parent=35 // pred_region
          %860 = dma.done [#allocation4], 16
        $region52: #{tpu_custom_call.1} parent=35 // pred_fallthru
          _
      $region36: #{tpu_custom_call.1} parent=5 // pred_fallthru
        _
      %p861 = scmp.le.s32.totalorder 2, %s11
      // Predicated region
      $region53: #{tpu_custom_call.1} parent=5 // pred_check
        %p862 = pneg %p861
      $region54: #{tpu_custom_call.1} parent=5 // pred_check_branch
        %864 = sbr.rel (%p862) target = $region56
      $region55: #{tpu_custom_call.1} parent=5 // pred_region
        %s865 = ssub.s32 %s11, 2
      $region56: #{tpu_custom_call.1} parent=5 // pred_fallthru
        _
    $region6: #{tpu_custom_call.1} parent=1 // loop_footer
      %s15 = sadd.s32 1, %s11
    $region7: #{tpu_custom_call.1} parent=1 // loop_footer_branch
      %10 = sbr.rel target = $region3
    $region8: #{tpu_custom_call.1} parent=1 // loop_exit
      _
    %866 = vsyncpa [#allocation4], 1
    %s867 = scalar_lea.sflag [#allocation4], 1
    %868 = vsyncpa %s867, 1

</llo_original>
